<compile_context>
chip_gen: v7x
topology: tpu7x:2x2x1
jax: 0.10.0
libtpu: 0.0.40
codegen_flags: <defaults>
</compile_context>

<pallas_src>
import jax
import jax.numpy as jnp
from jax import lax
from jax.experimental import pallas as pl
from jax.experimental.pallas import tpu as pltpu


def _round_up(x, m):
    return ((x + m - 1) // m) * m


# ----------------------------------------------------------------------------
# Kernel bodies (one per static (has_ctx, lane_dense) combination)
# ----------------------------------------------------------------------------
def _make_mlp_kernel(has_ctx: bool, lane_dense: bool):
    """3-layer MLP kernel.  Flags are Python-static (baked at trace time)."""

    def kernel(*refs):
        if has_ctx:
            (xa_ref, xb_ref, w1a_ref, w1b_ref, b1_ref,
             w2_ref, b2_ref, w3_ref, b3_ref, o_ref) = refs
        else:
            (xa_ref, w1a_ref, b1_ref,
             w2_ref, b2_ref, w3_ref, b3_ref, o_ref) = refs
            xb_ref = w1b_ref = None

        cdt = w1a_ref.dtype   # compute/streaming dtype of the weights (f32 or bf16)

        # ---- Layer 1: fused concat -> h1 = xa@W1a (+ xb@W1b) + b1, f32 accumulate ----
        xa = xa_ref[...].astype(cdt)   # cast in VMEM (no extra HBM pass in the wrapper)
        h1 = jnp.dot(xa, w1a_ref[...], preferred_element_type=jnp.float32)
        if has_ctx:
            xb = xb_ref[...].astype(cdt)
            h1 = h1 + jnp.dot(xb, w1b_ref[...], preferred_element_type=jnp.float32)
        h1 = jnp.maximum(h1 + b1_ref[...], 0.0)          # bias + ReLU in f32 (v5e-safe)
        h1 = h1.astype(w2_ref.dtype)

        # ---- Layer 2 ----
        h2 = jnp.dot(h1, w2_ref[...], preferred_element_type=jnp.float32) + b2_ref[...]
        h2 = jnp.maximum(h2, 0.0).astype(w3_ref.dtype)

        # ---- Head ----
        if lane_dense:
            # W3: (out, hid), h2: (tile_n, hid); contract hid via the transposed-RHS MXU
            # path (no materialized h2.T) -> (out, tile_n) lane-dense block.
            y = lax.dot_general(w3_ref[...], h2,
                                dimension_numbers=(((1,), (1,)), ((), ())),
                                preferred_element_type=jnp.float32)
            y = y + b3_ref[...]                            # (out, 1) broadcasts over lanes
        else:
            # Wide head (out_size >= 128): already lane-dense in (tile_n, out_size) layout.
            y = jnp.dot(h2, w3_ref[...], preferred_element_type=jnp.float32) + b3_ref[...]

        o_ref[...] = y.astype(o_ref.dtype)

    return kernel


# ----------------------------------------------------------------------------
# One-time parameter preparation (hoisted out of the per-call path)
# ----------------------------------------------------------------------------
def prepare_predictor_params(params, seed_flat_size, *, compute_dtype=jnp.float32):
    """Transpose / split / cast PyTorch-convention weights once at model-load time.

    params          : w1 (hid, in), b1 (hid,), w2 (hid, hid), b2 (hid,),
                      w3 (out, hid), b3 (out,)
    seed_flat_size  : num_seeds * seed_embed_size (width of the seed part of the input)
    compute_dtype   : dtype streamed to the MXU (bf16 halves weight+activation HBM reads
                      on all generations; f32 accumulation is used either way).
    """
    hid = params["w1"].shape[0]
    in_size = params["w1"].shape[1]
    out_size = params["w3"].shape[0]
    ctx_size = in_size - seed_flat_size

    w1 = params["w1"].astype(compute_dtype)                       # (hid, in_size)
    prepared = {
        "w1a": w1[:, :seed_flat_size].T,                          # (da, hid)
        "b1": params["b1"].reshape(1, hid).astype(jnp.float32),
        "w2": params["w2"].T.astype(compute_dtype),               # (hid, hid)
        "b2": params["b2"].reshape(1, hid).astype(jnp.float32),
    }
    if ctx_size > 0:
        prepared["w1b"] = w1[:, seed_flat_size:].T                # (db, hid)

    lane_dense = out_size < 128
    if lane_dense:
        # Keep PyTorch (out, hid) orientation: the kernel contracts hid directly.
        prepared["w3"] = params["w3"].astype(compute_dtype)                   # (out, hid)
        prepared["b3"] = params["b3"].reshape(out_size, 1).astype(jnp.float32)
    else:
        prepared["w3"] = params["w3"].T.astype(compute_dtype)                 # (hid, out)
        prepared["b3"] = params["b3"].reshape(1, out_size).astype(jnp.float32)
    prepared["lane_dense"] = lane_dense
    return prepared


# ----------------------------------------------------------------------------
# Tile sizing from an explicit VMEM budget
# ----------------------------------------------------------------------------
def _choose_tile_n(N, da, db, hid, out_size, x_itemsize, w_itemsize, lane_dense,
                   *, max_tile=4096, vmem_budget_bytes=10 * 1024 * 1024):
    """Pick the batch tile: as big as the budget allows, multiple of 128, and such
    that v7x's two TensorCores both get grid steps when there is enough work."""
    n_up = _round_up(max(int(N), 1), 128)

    # Fixed (tile-independent) VMEM: resident weights/biases (assume double-buffered).
    w_elems = (da + db) * hid + hid * hid + hid * out_size
    fixed = 2 * (w_elems * w_itemsize + 4 * (2 * hid + 2 * out_size))

    # Per-row VMEM: x blocks (double-buffered), h1/h2 temporaries, output block.
    out_lanes = out_size if lane_dense else _round_up(out_size, 128)
    per_row = (2 * (_round_up(da, 128) + (_round_up(db, 128) if db else 0)) * x_itemsize
               + 2 * _round_up(hid, 128) * 4
               + 2 * out_lanes * 4)

    avail = max(vmem_budget_bytes - fixed, 128 * per_row)
    tile = max(128, min(max_tile, (avail // per_row) // 128 * 128))
    tile = min(tile, n_up)                           # never bigger than the rounded batch

    # v7x megacore: prefer >= 2 grid steps so both TensorCores are fed.
    if n_up >= 256 and pl.cdiv(n_up, tile) < 2:
        tile = max(128, _round_up(n_up // 2, 128))
    return int(tile)


# ----------------------------------------------------------------------------
# Forward wrapper
# ----------------------------------------------------------------------------
def predictor_forward(seed_embeds, seed_ctx_embeds, prepared, *, tile_n=None):
    """Pallas Predictor forward (eval mode).

    seed_embeds     : (N, K1, D1) or (N, D1)
    seed_ctx_embeds : (N, D2) or None
    prepared        : output of prepare_predictor_params()
    returns         : (N, out_size), squeezed to (N,) if out_size == 1.
    """
    N = seed_embeds.shape[0]
    xa = seed_embeds.reshape(N, -1)                        # no concat materialization
    has_ctx = seed_ctx_embeds is not None
    assert has_ctx == ("w1b" in prepared), "ctx presence must match prepared params"

    da, hid = prepared["w1a"].shape
    db = prepared["w1b"].shape[0] if has_ctx else 0
    lane_dense = prepared["lane_dense"]
    out_size = prepared["w3"].shape[0] if lane_dense else prepared["w3"].shape[1]
    assert xa.shape[1] == da
    if has_ctx:
        xb = seed_ctx_embeds
        assert xb.shape == (N, db)

    x_itemsize = jnp.dtype(xa.dtype).itemsize
    w_itemsize = jnp.dtype(prepared["w1a"].dtype).itemsize
    if tile_n is None:
        tile_n = _choose_tile_n(N, da, db, hid, out_size, x_itemsize, w_itemsize,
                                lane_dense)
    else:
        tile_n = max(128, _round_up(int(tile_n), 128))

    grid_n = pl.cdiv(N, tile_n)
    m_total = grid_n * tile_n   # output allocated so every output block is full (unmasked)

    # BlockSpecs.  No jnp.pad over the activations: the ragged last x tile is a Pallas
    # partial block (OOB rows undefined -> garbage rows past N, sliced off below).
    const = lambda i: (0, 0)
    in_specs = [pl.BlockSpec((tile_n, da), lambda i: (i, 0))]
    operands = [xa]
    if has_ctx:
        in_specs.append(pl.BlockSpec((tile_n, db), lambda i: (i, 0)))
        operands.append(xb)
    in_specs.append(pl.BlockSpec((da, hid), const))        # W1a (VMEM-resident)
    operands.append(prepared["w1a"])
    if has_ctx:
        in_specs.append(pl.BlockSpec((db, hid), const))     # W1b (VMEM-resident)
        operands.append(prepared["w1b"])
    in_specs += [pl.BlockSpec((1, hid), const),              # b1
                 pl.BlockSpec((hid, hid), const),            # W2
                 pl.BlockSpec((1, hid), const)]              # b2
    operands += [prepared["b1"], prepared["w2"], prepared["b2"]]

    if lane_dense:
        in_specs += [pl.BlockSpec((out_size, hid), const),   # W3 (out, hid)
                     pl.BlockSpec((out_size, 1), const)]     # b3
        out_spec = pl.BlockSpec((out_size, tile_n), lambda i: (0, i))
        out_shape = jax.ShapeDtypeStruct((out_size, m_total), jnp.float32)
    else:
        in_specs += [pl.BlockSpec((hid, out_size), const),   # W3 (hid, out)
                     pl.BlockSpec((1, out_size), const)]     # b3
        out_spec = pl.BlockSpec((tile_n, out_size), lambda i: (i, 0))
        out_shape = jax.ShapeDtypeStruct((m_total, out_size), jnp.float32)
    operands += [prepared["w3"], prepared["b3"]]

    # Advisory cost estimate for the XLA scheduler.
    flops = 2 * m_total * ((da + db) * hid + hid * hid + hid * out_size)
    bytes_accessed = (N * (da + db) * x_itemsize
                      + m_total * out_size * 4
                      + ((da + db) * hid + hid * hid + hid * out_size) * w_itemsize
                      + (2 * hid + out_size + 1) * 4)
    cost = pl.CostEstimate(flops=int(flops), transcendentals=0,
                           bytes_accessed=int(bytes_accessed))

    out = pl.pallas_call(
        _make_mlp_kernel(has_ctx, lane_dense),
        out_shape=out_shape,
        grid_spec=pltpu.PrefetchScalarGridSpec(
            num_scalar_prefetch=0,
            grid=(grid_n,),
            in_specs=in_specs,
            out_specs=out_spec,
        ),
        compiler_params=pltpu.CompilerParams(dimension_semantics=("parallel",)),
        cost_estimate=cost,
    )(*operands)

    if lane_dense:
        if out_size == 1:
            return out[0, :N]              # .squeeze(-1) semantics
        return out[:, :N].T                # tiny (out, N) -> (N, out) transpose in wrapper
    return out[:N]


# ----------------------------------------------------------------------------
# Reference + synthetic init + self-test
# ----------------------------------------------------------------------------
def _init_params(key, in_size, hid, out_size):
    """Deterministic synthetic init (PyTorch Linear weight convention: (out, in))."""
    k = jax.random.split(key, 6)
    s1 = 1.0 / jnp.sqrt(in_size)
    s2 = 1.0 / jnp.sqrt(hid)
    return {
        "w1": jax.random.uniform(k[0], (hid, in_size), jnp.float32, -s1, s1),
        "b1": jax.random.uniform(k[1], (hid,), jnp.float32, -s1, s1),
        "w2": jax.random.uniform(k[2], (hid, hid), jnp.float32, -s2, s2),
        "b2": jax.random.uniform(k[3], (hid,), jnp.float32, -s2, s2),
        "w3": jax.random.uniform(k[4], (out_size, hid), jnp.float32, -s2, s2),
        "b3": jax.random.uniform(k[5], (out_size,), jnp.float32, -s2, s2),
    }


def _reference_forward(seed_embeds, seed_ctx_embeds, params):
    N = seed_embeds.shape[0]
    x = seed_embeds.reshape(N, -1)
    if seed_ctx_embeds is not None:
        x = jnp.concatenate([x, seed_ctx_embeds], axis=1)
    h = jnp.maximum(x @ params["w1"].T + params["b1"], 0.0)
    h = jnp.maximum(h @ params["w2"].T + params["b2"], 0.0)
    y = h @ params["w3"].T + params["b3"]
    return jnp.squeeze(y, -1) if y.shape[-1] == 1 else y


if __name__ == "__main__":
    # Module-consistent small shapes:
    #   num_seeds K1 = 2, seed_embed_size D1 = 16, seed_ctx_embed_size D2 = 8
    #   -> in_size = 2*16 + 8 = 40; predictor hid_size = 32
    N, K1, D1, D2 = 8, 2, 16, 8
    HID = 32
    IN_SIZE = K1 * D1 + D2

    key = jax.random.PRNGKey(0)
    k_seed, k_ctx, k_reg, k_cls, k_big = jax.random.split(key, 5)
    seed_embeds = jax.random.normal(k_seed, (N, K1, D1), jnp.float32)
    seed_ctx_embeds = jax.random.normal(k_ctx, (N, D2), jnp.float32)

    # 1) Regression (out_size = 1): lane-dense head, f32, fused concat.
    p_reg = _init_params(k_reg, IN_SIZE, HID, 1)
    prep_reg = prepare_predictor_params(p_reg, seed_flat_size=K1 * D1)
    y = jax.block_until_ready(predictor_forward(seed_embeds, seed_ctx_embeds, prep_reg))
    y_ref = _reference_forward(seed_embeds, seed_ctx_embeds, p_reg)
    assert y.shape == (N,), y.shape
    assert jnp.allclose(y, y_ref, atol=1e-5, rtol=1e-5), (y, y_ref)

    # 2) bf16 weight streaming (one-time prep cast; activations cast in-kernel), f32 acc.
    prep_bf16 = prepare_predictor_params(p_reg, seed_flat_size=K1 * D1,
                                         compute_dtype=jnp.bfloat16)
    y_bf16 = jax.block_until_ready(
        predictor_forward(seed_embeds, seed_ctx_embeds, prep_bf16))
    assert y_bf16.shape == (N,), y_bf16.shape
    assert jnp.allclose(y_bf16, y_ref, atol=1e-1, rtol=1e-1), (y_bf16, y_ref)

    # 3) Classification (out_size = 4): lane-dense (out, tile_n) head + tiny wrapper T.
    p_cls = _init_params(k_cls, IN_SIZE, HID, 4)
    prep_cls = prepare_predictor_params(p_cls, seed_flat_size=K1 * D1)
    logits = jax.block_until_ready(
        predictor_forward(seed_embeds, seed_ctx_embeds, prep_cls))
    logits_ref = _reference_forward(seed_embeds, seed_ctx_embeds, p_cls)
    assert logits.shape == (N, 4), logits.shape
    assert jnp.allclose(logits, logits_ref, atol=1e-5, rtol=1e-5), (logits, logits_ref)

    # 4) Multi-step grid + ragged last tile (no padding pass), N = 300 -> grid of 2.
    N_big = 300
    seed_big = jax.random.normal(k_big, (N_big, K1, D1), jnp.float32)
    ctx_big = jax.random.normal(k_ctx, (N_big, D2), jnp.float32)
    y_big = jax.block_until_ready(predictor_forward(seed_big, ctx_big, prep_reg))
    y_big_ref = _reference_forward(seed_big, ctx_big, p_reg)
    assert y_big.shape == (N_big,), y_big.shape
    assert jnp.allclose(y_big, y_big_ref, atol=1e-5, rtol=1e-5)

    # 5) No-context path (seed_ctx_embeds is None).
    p_noctx = _init_params(k_reg, K1 * D1, HID, 1)
    prep_noctx = prepare_predictor_params(p_noctx, seed_flat_size=K1 * D1)
    y_nc = jax.block_until_ready(predictor_forward(seed_embeds, None, prep_noctx))
    y_nc_ref = _reference_forward(seed_embeds, None, p_noctx)
    assert y_nc.shape == (N,), y_nc.shape
    assert jnp.allclose(y_nc, y_nc_ref, atol=1e-5, rtol=1e-5)

    print("KERNEL_OK")
</pallas_src>

<mosaic_0001>
module attributes {stable_mosaic.version = 11 : i64} {
  func.func @kernel(%arg0: i32, %arg1: memref<128x32xf32, #tpu.memory_space<vmem>>, %arg2: memref<128x8xf32, #tpu.memory_space<vmem>>, %arg3: memref<32x32xf32, #tpu.memory_space<vmem>>, %arg4: memref<8x32xf32, #tpu.memory_space<vmem>>, %arg5: memref<1x32xf32, #tpu.memory_space<vmem>>, %arg6: memref<32x32xf32, #tpu.memory_space<vmem>>, %arg7: memref<1x32xf32, #tpu.memory_space<vmem>>, %arg8: memref<1x32xf32, #tpu.memory_space<vmem>>, %arg9: memref<1x1xf32, #tpu.memory_space<vmem>>, %arg10: memref<1x128xf32, #tpu.memory_space<vmem>>) attributes {dimension_semantics = [#tpu.dimension_semantics<parallel>], iteration_bounds = array<i64: 1>, scalar_prefetch = 0 : i64, scratch_operands = 0 : i64, tpu.core_type = #tpu.core_type<tc>, window_params = [{transform_indices = @transform_0, window_bounds = array<i64: 128, 32>}, {transform_indices = @transform_1, window_bounds = array<i64: 128, 8>}, {pipeline_mode = #tpu.pipeline_mode<synchronous>, transform_indices = @transform_2, window_bounds = array<i64: 32, 32>}, {pipeline_mode = #tpu.pipeline_mode<synchronous>, transform_indices = @transform_3, window_bounds = array<i64: 8, 32>}, {pipeline_mode = #tpu.pipeline_mode<synchronous>, transform_indices = @transform_4, window_bounds = array<i64: 1, 32>}, {pipeline_mode = #tpu.pipeline_mode<synchronous>, transform_indices = @transform_5, window_bounds = array<i64: 32, 32>}, {pipeline_mode = #tpu.pipeline_mode<synchronous>, transform_indices = @transform_6, window_bounds = array<i64: 1, 32>}, {pipeline_mode = #tpu.pipeline_mode<synchronous>, transform_indices = @transform_7, window_bounds = array<i64: 1, 32>}, {pipeline_mode = #tpu.pipeline_mode<synchronous>, transform_indices = @transform_8, window_bounds = array<i64: 1, 1>}, {transform_indices = @transform_9, window_bounds = array<i64: 1, 128>}]} {
    %c0 = arith.constant 0 : index
    %c0_0 = arith.constant 0 : index
    %0 = vector.load %arg1[%c0, %c0_0] : memref<128x32xf32, #tpu.memory_space<vmem>>, vector<128x32xf32>
    %c0_1 = arith.constant 0 : index
    %c0_2 = arith.constant 0 : index
    %1 = vector.load %arg3[%c0_1, %c0_2] : memref<32x32xf32, #tpu.memory_space<vmem>>, vector<32x32xf32>
    %cst = arith.constant dense<0.000000e+00> : vector<128x32xf32>
    %2 = tpu.matmul %0, %1, %cst {dimension_numbers = #tpu.dot_dimension_numbers<[1], [0], [0], [1], [0, 0, 1, 1], [], []>} : vector<128x32xf32>, vector<32x32xf32>, vector<128x32xf32> -> vector<128x32xf32>
    %c0_3 = arith.constant 0 : index
    %c0_4 = arith.constant 0 : index
    %3 = vector.load %arg2[%c0_3, %c0_4] : memref<128x8xf32, #tpu.memory_space<vmem>>, vector<128x8xf32>
    %c0_5 = arith.constant 0 : index
    %c0_6 = arith.constant 0 : index
    %4 = vector.load %arg4[%c0_5, %c0_6] : memref<8x32xf32, #tpu.memory_space<vmem>>, vector<8x32xf32>
    %cst_7 = arith.constant dense<0.000000e+00> : vector<128x32xf32>
    %5 = tpu.matmul %3, %4, %cst_7 {dimension_numbers = #tpu.dot_dimension_numbers<[1], [0], [0], [1], [0, 0, 1, 1], [], []>} : vector<128x8xf32>, vector<8x32xf32>, vector<128x32xf32> -> vector<128x32xf32>
    %6 = arith.addf %2, %5 : vector<128x32xf32>
    %c0_8 = arith.constant 0 : index
    %c0_9 = arith.constant 0 : index
    %7 = vector.load %arg5[%c0_8, %c0_9] : memref<1x32xf32, #tpu.memory_space<vmem>>, vector<1x32xf32>
    %8 = vector.broadcast %7 : vector<1x32xf32> to vector<128x32xf32>
    %9 = arith.addf %6, %8 : vector<128x32xf32>
    %cst_10 = arith.constant 0.000000e+00 : f32
    %10 = vector.broadcast %cst_10 : f32 to vector<128x32xf32>
    %11 = arith.maximumf %9, %10 : vector<128x32xf32>
    %c0_11 = arith.constant 0 : index
    %c0_12 = arith.constant 0 : index
    %12 = vector.load %arg6[%c0_11, %c0_12] : memref<32x32xf32, #tpu.memory_space<vmem>>, vector<32x32xf32>
    %cst_13 = arith.constant dense<0.000000e+00> : vector<128x32xf32>
    %13 = tpu.matmul %11, %12, %cst_13 {dimension_numbers = #tpu.dot_dimension_numbers<[1], [0], [0], [1], [0, 0, 1, 1], [], []>} : vector<128x32xf32>, vector<32x32xf32>, vector<128x32xf32> -> vector<128x32xf32>
    %c0_14 = arith.constant 0 : index
    %c0_15 = arith.constant 0 : index
    %14 = vector.load %arg7[%c0_14, %c0_15] : memref<1x32xf32, #tpu.memory_space<vmem>>, vector<1x32xf32>
    %15 = vector.broadcast %14 : vector<1x32xf32> to vector<128x32xf32>
    %16 = arith.addf %13, %15 : vector<128x32xf32>
    %cst_16 = arith.constant 0.000000e+00 : f32
    %17 = vector.broadcast %cst_16 : f32 to vector<128x32xf32>
    %18 = arith.maximumf %16, %17 : vector<128x32xf32>
    %c0_17 = arith.constant 0 : index
    %c0_18 = arith.constant 0 : index
    %19 = vector.load %arg8[%c0_17, %c0_18] : memref<1x32xf32, #tpu.memory_space<vmem>>, vector<1x32xf32>
    %cst_19 = arith.constant dense<0.000000e+00> : vector<1x128xf32>
    %20 = tpu.matmul %19, %18, %cst_19 {dimension_numbers = #tpu.dot_dimension_numbers<[1], [1], [0], [0], [0, 0, 1, 0], [], []>} : vector<1x32xf32>, vector<128x32xf32>, vector<1x128xf32> -> vector<1x128xf32>
    %c0_20 = arith.constant 0 : index
    %c0_21 = arith.constant 0 : index
    %21 = vector.load %arg9[%c0_20, %c0_21] : memref<1x1xf32, #tpu.memory_space<vmem>>, vector<1x1xf32>
    %22 = vector.broadcast %21 : vector<1x1xf32> to vector<1x128xf32>
    %23 = arith.addf %20, %22 : vector<1x128xf32>
    %c0_22 = arith.constant 0 : index
    %c0_23 = arith.constant 0 : index
    %24 = vector.load %arg10[%c0_22, %c0_23] : memref<1x128xf32, #tpu.memory_space<vmem>>, vector<1x128xf32>
    tpu.vector_store %arg10[%c0_22, %c0_23], %23 {strides = array<i32>} : memref<1x128xf32, #tpu.memory_space<vmem>>, vector<1x128xf32>,
    return
  }
  func.func @transform_0(%arg0: i32) -> (i32, i32) {
    %c0_i32 = arith.constant 0 : i32
    %c0_i32_0 = arith.constant 0 : i32
    return %arg0, %c0_i32 : i32, i32
  }
  func.func @transform_1(%arg0: i32) -> (i32, i32) {
    %c0_i32 = arith.constant 0 : i32
    %c0_i32_0 = arith.constant 0 : i32
    return %arg0, %c0_i32 : i32, i32
  }
  func.func @transform_2(%arg0: i32) -> (i32, i32) {
    %c0_i32 = arith.constant 0 : i32
    %c0_i32_0 = arith.constant 0 : i32
    %c0_i32_1 = arith.constant 0 : i32
    return %c0_i32, %c0_i32_0 : i32, i32
  }
  func.func @transform_3(%arg0: i32) -> (i32, i32) {
    %c0_i32 = arith.constant 0 : i32
    %c0_i32_0 = arith.constant 0 : i32
    %c0_i32_1 = arith.constant 0 : i32
    return %c0_i32, %c0_i32_0 : i32, i32
  }
  func.func @transform_4(%arg0: i32) -> (i32, i32) {
    %c0_i32 = arith.constant 0 : i32
    %c0_i32_0 = arith.constant 0 : i32
    %c0_i32_1 = arith.constant 0 : i32
    return %c0_i32, %c0_i32_0 : i32, i32
  }
  func.func @transform_5(%arg0: i32) -> (i32, i32) {
    %c0_i32 = arith.constant 0 : i32
    %c0_i32_0 = arith.constant 0 : i32
    %c0_i32_1 = arith.constant 0 : i32
    return %c0_i32, %c0_i32_0 : i32, i32
  }
  func.func @transform_6(%arg0: i32) -> (i32, i32) {
    %c0_i32 = arith.constant 0 : i32
    %c0_i32_0 = arith.constant 0 : i32
    %c0_i32_1 = arith.constant 0 : i32
    return %c0_i32, %c0_i32_0 : i32, i32
  }
  func.func @transform_7(%arg0: i32) -> (i32, i32) {
    %c0_i32 = arith.constant 0 : i32
    %c0_i32_0 = arith.constant 0 : i32
    %c0_i32_1 = arith.constant 0 : i32
    return %c0_i32, %c0_i32_0 : i32, i32
  }
  func.func @transform_8(%arg0: i32) -> (i32, i32) {
    %c0_i32 = arith.constant 0 : i32
    %c0_i32_0 = arith.constant 0 : i32
    %c0_i32_1 = arith.constant 0 : i32
    return %c0_i32, %c0_i32_0 : i32, i32
  }
  func.func @transform_9(%arg0: i32) -> (i32, i32) {
    %c0_i32 = arith.constant 0 : i32
    %c0_i32_0 = arith.constant 0 : i32
    return %c0_i32, %arg0 : i32, i32
  }
}

</mosaic_0001>

<llo_original>
// kernel: tpu_custom_call.1
$region0: #{tpu_custom_call.1}
  #allocation0 [shape = 'u32[]', space=smem, size = 0x4, offset = 0x4, fixed_abs, tag = 'smem constant byte address 0x4 - core index']
  #allocation1 [shape = 'u32[144,128]{1,0:T(1,128)}', space=vmem, size = 0x12000, scoped, tag = 'internal scratch']
  #allocation2 [shape = 'f32[1,1]{1,0:T(1,128)S(1)}', space=vmem, size = 0x200, scoped, tag = 'scoped memory for tpu_custom_call.1']
  %s0 = inlined_call_operand.hbm [shape: f32[8,32], index: 0, kind: input, shape index: {}]
  %s1 = inlined_call_operand.hbm [shape: f32[8,8], index: 1, kind: input, shape index: {}]
  %s2 = inlined_call_operand.hbm [shape: f32[32,32], index: 2, kind: input, shape index: {}]
  %s3 = inlined_call_operand.vmem [shape: f32[8,32], index: 3, kind: input, shape index: {}]
  %s4 = inlined_call_operand.vmem [shape: f32[1,32], index: 4, kind: input, shape index: {}]
  %s5 = inlined_call_operand.hbm [shape: f32[32,32], index: 5, kind: input, shape index: {}]
  %s6 = inlined_call_operand.vmem [shape: f32[1,32], index: 6, kind: input, shape index: {}]
  %s7 = inlined_call_operand.vmem [shape: f32[1,32], index: 7, kind: input, shape index: {}]
  %s8 = inlined_call_operand.<no memory space> [shape: f32[1,1], index: 8, kind: input, shape index: {}]
  %s9 = inlined_call_operand.hbm [shape: f32[1,128], index: 9, kind: output, shape index: {}]
  %s10 = sld [smem:[#allocation0]]
  $region62: #{tpu_custom_call.1} parent=0
    _
  %s12 = ssub.s32 1, %s10
  %s13 = scalar_select 0, %s12, %s10
  %v14 = vstv %s8
  %15 = vst [vmem:[#allocation2] sm:$0x1] %v14
  $region1: #{tpu_custom_call.1} parent=0
    #allocation3 [shape = 'u8[65536]{0}', space=vmem, size = 0x10000, scoped, tag = 'input window, operand 0, single buffered']
    #allocation4 [shape = 's32[1]{0}', space=sflag, size = 0x4, scoped, tag = 'scoped memory for tpu_custom_call.1']
    #allocation5 [shape = 's32[1]{0}', space=sflag, size = 0x4, scoped, tag = 'scoped memory for tpu_custom_call.1']
    #allocation6 [shape = 'u8[65536]{0}', space=vmem, size = 0x10000, scoped, tag = 'input window, operand 1, single buffered']
    #allocation7 [shape = 's32[1]{0}', space=sflag, size = 0x4, scoped, tag = 'scoped memory for tpu_custom_call.1']
    #allocation8 [shape = 'u8[16384]{0}', space=vmem, size = 0x4000, scoped, tag = 'input window, operand 2, single buffered']
    #allocation9 [shape = 'u8[16384]{0}', space=vmem, size = 0x4000, scoped, tag = 'input window, operand 5, single buffered']
    #allocation10 [shape = 's32[1]{0}', space=sflag, size = 0x4, scoped, tag = 'scoped memory for tpu_custom_call.1']
    #allocation11 [shape = 'u8[512]{0}', space=vmem, size = 0x400, scoped, tag = 'output window, operand 0, single buffered']
    %16 = vsyncpa [#allocation4], 0
    %17 = vsyncpa [#allocation7], 0
    %18 = vsyncpa [#allocation10], 0
    %19 = vsyncpa [#allocation5], 0
    // Predicated region
    $region2: #{tpu_custom_call.1} parent=1 // pred_check
      _
    $region3: #{tpu_custom_call.1} parent=1 // pred_check_branch
      %21 = sbr.rel (0) target = $region5
    $region4: #{tpu_custom_call.1} parent=1 // pred_region
      %s23 = ssub.s32 2048, 128
      %24 = vsyncadd [#allocation4], %s23
      %s25 = sshll.u32 [#allocation3], 4
      %s26 = int_to_ptr.vmem [resolvable:$true] %s25
      %31 = dma.hbm_to_vmem [thread:$0]  %s0, 128, %s26, [#allocation4], 128, 128, 8
    $region5: #{tpu_custom_call.1} parent=1 // pred_fallthru
      _
    // Predicated region
    $region6: #{tpu_custom_call.1} parent=1 // pred_check
      _
    $region7: #{tpu_custom_call.1} parent=1 // pred_check_branch
      %33 = sbr.rel (0) target = $region9
    $region8: #{tpu_custom_call.1} parent=1 // pred_region
      %s35 = ssub.s32 2048, 128
      %36 = vsyncadd [#allocation7], %s35
      %s37 = sshll.u32 [#allocation6], 4
      %s38 = int_to_ptr.vmem [resolvable:$true] %s37
      %43 = dma.hbm_to_vmem [thread:$0]  %s1, 128, %s38, [#allocation7], 128, 128, 8
    $region9: #{tpu_custom_call.1} parent=1 // pred_fallthru
      _
    // Predicated region
    $region10: #{tpu_custom_call.1} parent=1 // pred_check
      _
    $region11: #{tpu_custom_call.1} parent=1 // pred_check_branch
      %45 = sbr.rel (0) target = $region13
    $region12: #{tpu_custom_call.1} parent=1 // pred_region
      %s47 = ssub.s32 512, 512
      %48 = vsyncadd [#allocation7], %s47
      %s49 = sshll.u32 [#allocation8], 4
      %s50 = int_to_ptr.vmem [resolvable:$true] %s49
      %55 = dma.hbm_to_vmem [thread:$0]  %s2, 512, %s50, [#allocation7], 128, 128, 8
    $region13: #{tpu_custom_call.1} parent=1 // pred_fallthru
      _
    // Predicated region
    $region14: #{tpu_custom_call.1} parent=1 // pred_check
      _
    $region15: #{tpu_custom_call.1} parent=1 // pred_check_branch
      %57 = sbr.rel (0) target = $region17
    $region16: #{tpu_custom_call.1} parent=1 // pred_region
      _
    $region17: #{tpu_custom_call.1} parent=1 // pred_fallthru
      _
    // Predicated region
    $region18: #{tpu_custom_call.1} parent=1 // pred_check
      _
    $region19: #{tpu_custom_call.1} parent=1 // pred_check_branch
      %59 = sbr.rel (0) target = $region21
    $region20: #{tpu_custom_call.1} parent=1 // pred_region
      _
    $region21: #{tpu_custom_call.1} parent=1 // pred_fallthru
      _
    // Predicated region
    $region22: #{tpu_custom_call.1} parent=1 // pred_check
      _
    $region23: #{tpu_custom_call.1} parent=1 // pred_check_branch
      %61 = sbr.rel (0) target = $region25
    $region24: #{tpu_custom_call.1} parent=1 // pred_region
      %s63 = ssub.s32 512, 512
      %64 = vsyncadd [#allocation10], %s63
      %s65 = sshll.u32 [#allocation9], 4
      %s66 = int_to_ptr.vmem [resolvable:$true] %s65
      %71 = dma.hbm_to_vmem [thread:$0]  %s5, 512, %s66, [#allocation10], 128, 128, 8
    $region25: #{tpu_custom_call.1} parent=1 // pred_fallthru
      _
    // Predicated region
    $region26: #{tpu_custom_call.1} parent=1 // pred_check
      _
    $region27: #{tpu_custom_call.1} parent=1 // pred_check_branch
      %73 = sbr.rel (0) target = $region29
    $region28: #{tpu_custom_call.1} parent=1 // pred_region
      _
    $region29: #{tpu_custom_call.1} parent=1 // pred_fallthru
      _
    // Predicated region
    $region30: #{tpu_custom_call.1} parent=1 // pred_check
      _
    $region31: #{tpu_custom_call.1} parent=1 // pred_check_branch
      %75 = sbr.rel (0) target = $region33
    $region32: #{tpu_custom_call.1} parent=1 // pred_region
      _
    $region33: #{tpu_custom_call.1} parent=1 // pred_fallthru
      _
    // Predicated region
    $region34: #{tpu_custom_call.1} parent=1 // pred_check
      _
    $region35: #{tpu_custom_call.1} parent=1 // pred_check_branch
      %77 = sbr.rel (0) target = $region37
    $region36: #{tpu_custom_call.1} parent=1 // pred_region
      _
    $region37: #{tpu_custom_call.1} parent=1 // pred_fallthru
      _
    // Predicated region
    $region38: #{tpu_custom_call.1} parent=1 // pred_check
      _
    $region39: #{tpu_custom_call.1} parent=1 // pred_check_branch
      %79 = sbr.rel (0) target = $region41
    $region40: #{tpu_custom_call.1} parent=1 // pred_region
      %80 = dma.done [#allocation4], 2048
    $region41: #{tpu_custom_call.1} parent=1 // pred_fallthru
      _
    // Predicated region
    $region42: #{tpu_custom_call.1} parent=1 // pred_check
      _
    $region43: #{tpu_custom_call.1} parent=1 // pred_check_branch
      %82 = sbr.rel (0) target = $region45
    $region44: #{tpu_custom_call.1} parent=1 // pred_region
      %83 = dma.done [#allocation7], 2048
    $region45: #{tpu_custom_call.1} parent=1 // pred_fallthru
      _
    // Predicated region
    $region46: #{tpu_custom_call.1} parent=1 // pred_check
      _
    $region47: #{tpu_custom_call.1} parent=1 // pred_check_branch
      %85 = sbr.rel (0) target = $region49
    $region48: #{tpu_custom_call.1} parent=1 // pred_region
      %86 = dma.done [#allocation7], 512
    $region49: #{tpu_custom_call.1} parent=1 // pred_fallthru
      _
    // Predicated region
    $region50: #{tpu_custom_call.1} parent=1 // pred_check
      _
    $region51: #{tpu_custom_call.1} parent=1 // pred_check_branch
      %88 = sbr.rel (0) target = $region53
    $region52: #{tpu_custom_call.1} parent=1 // pred_region
      %89 = dma.done [#allocation10], 512
    $region53: #{tpu_custom_call.1} parent=1 // pred_fallthru
      _
    %v90 = vld [vmem:[#allocation3] sm:$0xff]
    %v91 = vld [vmem:[#allocation3 + $0x8] sm:$0xff]
    %v92 = vld [vmem:[#allocation3 + $0x10] sm:$0xff]
    %v93 = vld [vmem:[#allocation3 + $0x18] sm:$0xff]
    %v94 = vld [vmem:[#allocation3 + $0x20] sm:$0xff]
    %v95 = vld [vmem:[#allocation3 + $0x28] sm:$0xff]
    %v96 = vld [vmem:[#allocation3 + $0x30] sm:$0xff]
    %v97 = vld [vmem:[#allocation3 + $0x38] sm:$0xff]
    %v98 = vld [vmem:[#allocation3 + $0x40] sm:$0xff]
    %v99 = vld [vmem:[#allocation3 + $0x48] sm:$0xff]
    %v100 = vld [vmem:[#allocation3 + $0x50] sm:$0xff]
    %v101 = vld [vmem:[#allocation3 + $0x58] sm:$0xff]
    %v102 = vld [vmem:[#allocation3 + $0x60] sm:$0xff]
    %v103 = vld [vmem:[#allocation3 + $0x68] sm:$0xff]
    %v104 = vld [vmem:[#allocation3 + $0x70] sm:$0xff]
    %v105 = vld [vmem:[#allocation3 + $0x78] sm:$0xff]
    %v106 = vld [vmem:[#allocation8] sm:$0xff]
    %v107 = vld [vmem:[#allocation8 + $0x8] sm:$0xff]
    %v108 = vld [vmem:[#allocation8 + $0x10] sm:$0xff]
    %v109 = vld [vmem:[#allocation8 + $0x18] sm:$0xff]
    %v110 = vld [vmem:[#allocation6] sm:$0xff]
    %v111 = vld [vmem:[#allocation6 + $0x8] sm:$0xff]
    %v112 = vld [vmem:[#allocation6 + $0x10] sm:$0xff]
    %v113 = vld [vmem:[#allocation6 + $0x18] sm:$0xff]
    %v114 = vld [vmem:[#allocation6 + $0x20] sm:$0xff]
    %v115 = vld [vmem:[#allocation6 + $0x28] sm:$0xff]
    %v116 = vld [vmem:[#allocation6 + $0x30] sm:$0xff]
    %v117 = vld [vmem:[#allocation6 + $0x38] sm:$0xff]
    %v118 = vld [vmem:[#allocation6 + $0x40] sm:$0xff]
    %v119 = vld [vmem:[#allocation6 + $0x48] sm:$0xff]
    %v120 = vld [vmem:[#allocation6 + $0x50] sm:$0xff]
    %v121 = vld [vmem:[#allocation6 + $0x58] sm:$0xff]
    %v122 = vld [vmem:[#allocation6 + $0x60] sm:$0xff]
    %v123 = vld [vmem:[#allocation6 + $0x68] sm:$0xff]
    %v124 = vld [vmem:[#allocation6 + $0x70] sm:$0xff]
    %v125 = vld [vmem:[#allocation6 + $0x78] sm:$0xff]
    %v126 = vld [vmem:[%s3] sm:$0xff]
    %vm127 = vcmask 64512
    %v129 = vsel %vm127, %v110, 0
    %v132 = vsel %vm127, %v111, 0
    %v135 = vsel %vm127, %v112, 0
    %v138 = vsel %vm127, %v113, 0
    %v141 = vsel %vm127, %v114, 0
    %v144 = vsel %vm127, %v115, 0
    %v147 = vsel %vm127, %v116, 0
    %v150 = vsel %vm127, %v117, 0
    %v153 = vsel %vm127, %v118, 0
    %v156 = vsel %vm127, %v119, 0
    %v159 = vsel %vm127, %v120, 0
    %v162 = vsel %vm127, %v121, 0
    %v165 = vsel %vm127, %v122, 0
    %v168 = vsel %vm127, %v123, 0
    %v171 = vsel %vm127, %v124, 0
    %v174 = vsel %vm127, %v125, 0
    %176 = vmatprep.subr.mxu0 0.0
    %177 = vmatpush1.msra.mxu0 %v126
    %178 = vmatprep.subr.mxu0 0.0
    %179 = vmatpush1.msra.mxu0 0.0
    %180 = vmatprep.subr.mxu0 0.0
    %181 = vmatpush1.msra.mxu0 0.0
    %182 = vmatprep.subr.mxu0 0.0
    %183 = vmatpush1.msra.mxu0 0.0
    %184 = vmatprep.subr.mxu0 0.0
    %185 = vmatpush1.msra.mxu0 0.0
    %186 = vmatprep.subr.mxu0 0.0
    %187 = vmatpush1.msra.mxu0 0.0
    %188 = vmatprep.subr.mxu0 0.0
    %189 = vmatpush1.msra.mxu0 0.0
    %190 = vmatprep.subr.mxu0 0.0
    %191 = vmatpush1.msra.mxu0 0.0
    %192 = vmatprep.subr.mxu0 0.0
    %193 = vmatpush1.msra.mxu0 0.0
    %194 = vmatprep.subr.mxu0 0.0
    %195 = vmatpush1.msra.mxu0 0.0
    %196 = vmatprep.subr.mxu0 0.0
    %197 = vmatpush1.msra.mxu0 0.0
    %198 = vmatprep.subr.mxu0 0.0
    %199 = vmatpush1.msra.mxu0 0.0
    %200 = vmatprep.subr.mxu0 0.0
    %201 = vmatpush1.msra.mxu0 0.0
    %202 = vmatprep.subr.mxu0 0.0
    %203 = vmatpush1.msra.mxu0 0.0
    %204 = vmatprep.subr.mxu0 0.0
    %205 = vmatpush1.msra.mxu0 0.0
    %206 = vmatprep.subr.mxu0 0.0
    %207 = vmatpush1.msra.mxu0 0.0
    %208 = vmatprep.subr.mxu0 0.0
    %209 = vmatpush1.msra.mxu0 0.0
    %210 = vmatprep.subr.mxu0 0.0
    %211 = vmatpush1.msra.mxu0 0.0
    %212 = vmatprep.subr.mxu0 0.0
    %213 = vmatpush1.msra.mxu0 0.0
    %214 = vmatprep.subr.mxu0 0.0
    %215 = vmatpush1.msra.mxu0 0.0
    %216 = vmatprep.subr.mxu0 0.0
    %217 = vmatpush1.msra.mxu0 0.0
    %218 = vmatprep.subr.mxu0 0.0
    %219 = vmatpush1.msra.mxu0 0.0
    %220 = vmatprep.subr.mxu0 0.0
    %221 = vmatpush1.msra.mxu0 0.0
    %222 = vmatprep.subr.mxu0 0.0
    %223 = vmatpush1.msra.mxu0 0.0
    %224 = vmatprep.subr.mxu0 0.0
    %225 = vmatpush1.msra.mxu0 0.0
    %226 = vmatprep.subr.mxu0 0.0
    %227 = vmatpush1.msra.mxu0 0.0
    %228 = vmatprep.subr.mxu0 0.0
    %229 = vmatpush1.msra.mxu0 0.0
    %230 = vmatprep.subr.mxu0 0.0
    %231 = vmatpush1.msra.mxu0 0.0
    %232 = vmatprep.subr.mxu0 0.0
    %233 = vmatpush1.msra.mxu0 0.0
    %234 = vmatprep.subr.mxu0 0.0
    %235 = vmatpush1.msra.mxu0 0.0
    %236 = vmatprep.subr.mxu0 0.0
    %237 = vmatpush1.msra.mxu0 0.0
    %238 = vmatprep.subr.mxu0 0.0
    %239 = vmatpush1.msra.mxu0 0.0
    %240 = vmatprep.mubr.f32.mxu0 0.0
    %241 = vmatmul.mubr.f32.gmra.mrb[0].mxu0 %v129
    %v242 = vpop.f32.mrb[0].mxu0
    %v243 = vadd.f32 0.0, %v242
    %v244 = vpop.f32.mrb[0].mxu0
    %245 = vmatprep.mubr.f32.mxu0 0.0
    %246 = vmatmul.mubr.f32.gmra.mrb[0].mxu0 %v132
    %v247 = vpop.f32.mrb[0].mxu0
    %v248 = vadd.f32 0.0, %v247
    %v249 = vpop.f32.mrb[0].mxu0
    %250 = vmatprep.mubr.f32.mxu0 0.0
    %251 = vmatmul.mubr.f32.gmra.mrb[0].mxu0 %v135
    %v252 = vpop.f32.mrb[0].mxu0
    %v253 = vadd.f32 0.0, %v252
    %v254 = vpop.f32.mrb[0].mxu0
    %255 = vmatprep.mubr.f32.mxu0 0.0
    %256 = vmatmul.mubr.f32.gmra.mrb[0].mxu0 %v138
    %v257 = vpop.f32.mrb[0].mxu0
    %v258 = vadd.f32 0.0, %v257
    %v259 = vpop.f32.mrb[0].mxu0
    %260 = vmatprep.mubr.f32.mxu0 0.0
    %261 = vmatmul.mubr.f32.gmra.mrb[0].mxu0 %v141
    %v262 = vpop.f32.mrb[0].mxu0
    %v263 = vadd.f32 0.0, %v262
    %v264 = vpop.f32.mrb[0].mxu0
    %265 = vmatprep.mubr.f32.mxu0 0.0
    %266 = vmatmul.mubr.f32.gmra.mrb[0].mxu0 %v144
    %v267 = vpop.f32.mrb[0].mxu0
    %v268 = vadd.f32 0.0, %v267
    %v269 = vpop.f32.mrb[0].mxu0
    %270 = vmatprep.mubr.f32.mxu0 0.0
    %271 = vmatmul.mubr.f32.gmra.mrb[0].mxu0 %v147
    %v272 = vpop.f32.mrb[0].mxu0
    %v273 = vadd.f32 0.0, %v272
    %v274 = vpop.f32.mrb[0].mxu0
    %275 = vmatprep.mubr.f32.mxu0 0.0
    %276 = vmatmul.mubr.f32.gmra.mrb[0].mxu0 %v150
    %v277 = vpop.f32.mrb[0].mxu0
    %v278 = vadd.f32 0.0, %v277
    %v279 = vpop.f32.mrb[0].mxu0
    %280 = vmatprep.mubr.f32.mxu0 0.0
    %281 = vmatmul.mubr.f32.gmra.mrb[0].mxu0 %v153
    %v282 = vpop.f32.mrb[0].mxu0
    %v283 = vadd.f32 0.0, %v282
    %v284 = vpop.f32.mrb[0].mxu0
    %285 = vmatprep.mubr.f32.mxu0 0.0
    %286 = vmatmul.mubr.f32.gmra.mrb[0].mxu0 %v156
    %v287 = vpop.f32.mrb[0].mxu0
    %v288 = vadd.f32 0.0, %v287
    %v289 = vpop.f32.mrb[0].mxu0
    %290 = vmatprep.mubr.f32.mxu0 0.0
    %291 = vmatmul.mubr.f32.gmra.mrb[0].mxu0 %v159
    %v292 = vpop.f32.mrb[0].mxu0
    %v293 = vadd.f32 0.0, %v292
    %v294 = vpop.f32.mrb[0].mxu0
    %295 = vmatprep.mubr.f32.mxu0 0.0
    %296 = vmatmul.mubr.f32.gmra.mrb[0].mxu0 %v162
    %v297 = vpop.f32.mrb[0].mxu0
    %v298 = vadd.f32 0.0, %v297
    %v299 = vpop.f32.mrb[0].mxu0
    %300 = vmatprep.mubr.f32.mxu0 0.0
    %301 = vmatmul.mubr.f32.gmra.mrb[0].mxu0 %v165
    %v302 = vpop.f32.mrb[0].mxu0
    %v303 = vadd.f32 0.0, %v302
    %v304 = vpop.f32.mrb[0].mxu0
    %305 = vmatprep.mubr.f32.mxu0 0.0
    %306 = vmatmul.mubr.f32.gmra.mrb[0].mxu0 %v168
    %v307 = vpop.f32.mrb[0].mxu0
    %v308 = vadd.f32 0.0, %v307
    %v309 = vpop.f32.mrb[0].mxu0
    %310 = vmatprep.mubr.f32.mxu0 0.0
    %311 = vmatmul.mubr.f32.gmra.mrb[0].mxu0 %v171
    %v312 = vpop.f32.mrb[0].mxu0
    %v313 = vadd.f32 0.0, %v312
    %v314 = vpop.f32.mrb[0].mxu0
    %315 = vmatprep.mubr.f32.mxu0 0.0
    %316 = vmatmul.mubr.f32.gmra.mrb[0].mxu0 %v174
    %v317 = vpop.f32.mrb[0].mxu0
    %v318 = vadd.f32 0.0, %v317
    %v319 = vpop.f32.mrb[0].mxu0
    %320 = vdwg.mxu0
    %vm321 = vcmask 261120
    %v323 = vsel %vm321, %v90, 0
    %v326 = vsel %vm321, %v91, 0
    %v329 = vsel %vm321, %v92, 0
    %v332 = vsel %vm321, %v93, 0
    %v335 = vsel %vm321, %v94, 0
    %v338 = vsel %vm321, %v95, 0
    %v341 = vsel %vm321, %v96, 0
    %v344 = vsel %vm321, %v97, 0
    %v347 = vsel %vm321, %v98, 0
    %v350 = vsel %vm321, %v99, 0
    %v353 = vsel %vm321, %v100, 0
    %v356 = vsel %vm321, %v101, 0
    %v359 = vsel %vm321, %v102, 0
    %v362 = vsel %vm321, %v103, 0
    %v365 = vsel %vm321, %v104, 0
    %v368 = vsel %vm321, %v105, 0
    %370 = vmatprep.subr.mxu0 0.0
    %371 = vmatpush1.msra.mxu0 %v106
    %372 = vmatprep.subr.mxu0 0.0
    %373 = vmatpush1.msra.mxu0 %v107
    %374 = vmatprep.subr.mxu0 0.0
    %375 = vmatpush1.msra.mxu0 %v108
    %376 = vmatprep.subr.mxu0 0.0
    %377 = vmatpush1.msra.mxu0 %v109
    %378 = vmatprep.subr.mxu0 0.0
    %379 = vmatpush1.msra.mxu0 0.0
    %380 = vmatprep.subr.mxu0 0.0
    %381 = vmatpush1.msra.mxu0 0.0
    %382 = vmatprep.subr.mxu0 0.0
    %383 = vmatpush1.msra.mxu0 0.0
    %384 = vmatprep.subr.mxu0 0.0
    %385 = vmatpush1.msra.mxu0 0.0
    %386 = vmatprep.subr.mxu0 0.0
    %387 = vmatpush1.msra.mxu0 0.0
    %388 = vmatprep.subr.mxu0 0.0
    %389 = vmatpush1.msra.mxu0 0.0
    %390 = vmatprep.subr.mxu0 0.0
    %391 = vmatpush1.msra.mxu0 0.0
    %392 = vmatprep.subr.mxu0 0.0
    %393 = vmatpush1.msra.mxu0 0.0
    %394 = vmatprep.subr.mxu0 0.0
    %395 = vmatpush1.msra.mxu0 0.0
    %396 = vmatprep.subr.mxu0 0.0
    %397 = vmatpush1.msra.mxu0 0.0
    %398 = vmatprep.subr.mxu0 0.0
    %399 = vmatpush1.msra.mxu0 0.0
    %400 = vmatprep.subr.mxu0 0.0
    %401 = vmatpush1.msra.mxu0 0.0
    %402 = vmatprep.subr.mxu0 0.0
    %403 = vmatpush1.msra.mxu0 0.0
    %404 = vmatprep.subr.mxu0 0.0
    %405 = vmatpush1.msra.mxu0 0.0
    %406 = vmatprep.subr.mxu0 0.0
    %407 = vmatpush1.msra.mxu0 0.0
    %408 = vmatprep.subr.mxu0 0.0
    %409 = vmatpush1.msra.mxu0 0.0
    %410 = vmatprep.subr.mxu0 0.0
    %411 = vmatpush1.msra.mxu0 0.0
    %412 = vmatprep.subr.mxu0 0.0
    %413 = vmatpush1.msra.mxu0 0.0
    %414 = vmatprep.subr.mxu0 0.0
    %415 = vmatpush1.msra.mxu0 0.0
    %416 = vmatprep.subr.mxu0 0.0
    %417 = vmatpush1.msra.mxu0 0.0
    %418 = vmatprep.subr.mxu0 0.0
    %419 = vmatpush1.msra.mxu0 0.0
    %420 = vmatprep.subr.mxu0 0.0
    %421 = vmatpush1.msra.mxu0 0.0
    %422 = vmatprep.subr.mxu0 0.0
    %423 = vmatpush1.msra.mxu0 0.0
    %424 = vmatprep.subr.mxu0 0.0
    %425 = vmatpush1.msra.mxu0 0.0
    %426 = vmatprep.subr.mxu0 0.0
    %427 = vmatpush1.msra.mxu0 0.0
    %428 = vmatprep.subr.mxu0 0.0
    %429 = vmatpush1.msra.mxu0 0.0
    %430 = vmatprep.subr.mxu0 0.0
    %431 = vmatpush1.msra.mxu0 0.0
    %432 = vmatprep.subr.mxu0 0.0
    %433 = vmatpush1.msra.mxu0 0.0
    %434 = vmatprep.mubr.f32.mxu0 0.0
    %435 = vmatmul.mubr.f32.gmra.mrb[0].mxu0 %v323
    %v436 = vpop.f32.mrb[0].mxu0
    %v437 = vadd.f32 %v243, %v436
    %v438 = vpop.f32.mrb[0].mxu0
    %439 = vmatprep.mubr.f32.mxu0 0.0
    %440 = vmatmul.mubr.f32.gmra.mrb[0].mxu0 %v326
    %v441 = vpop.f32.mrb[0].mxu0
    %v442 = vadd.f32 %v248, %v441
    %v443 = vpop.f32.mrb[0].mxu0
    %444 = vmatprep.mubr.f32.mxu0 0.0
    %445 = vmatmul.mubr.f32.gmra.mrb[0].mxu0 %v329
    %v446 = vpop.f32.mrb[0].mxu0
    %v447 = vadd.f32 %v253, %v446
    %v448 = vpop.f32.mrb[0].mxu0
    %449 = vmatprep.mubr.f32.mxu0 0.0
    %450 = vmatmul.mubr.f32.gmra.mrb[0].mxu0 %v332
    %v451 = vpop.f32.mrb[0].mxu0
    %v452 = vadd.f32 %v258, %v451
    %v453 = vpop.f32.mrb[0].mxu0
    %454 = vmatprep.mubr.f32.mxu0 0.0
    %455 = vmatmul.mubr.f32.gmra.mrb[0].mxu0 %v335
    %v456 = vpop.f32.mrb[0].mxu0
    %v457 = vadd.f32 %v263, %v456
    %v458 = vpop.f32.mrb[0].mxu0
    %459 = vmatprep.mubr.f32.mxu0 0.0
    %460 = vmatmul.mubr.f32.gmra.mrb[0].mxu0 %v338
    %v461 = vpop.f32.mrb[0].mxu0
    %v462 = vadd.f32 %v268, %v461
    %v463 = vpop.f32.mrb[0].mxu0
    %464 = vmatprep.mubr.f32.mxu0 0.0
    %465 = vmatmul.mubr.f32.gmra.mrb[0].mxu0 %v341
    %v466 = vpop.f32.mrb[0].mxu0
    %v467 = vadd.f32 %v273, %v466
    %v468 = vpop.f32.mrb[0].mxu0
    %469 = vmatprep.mubr.f32.mxu0 0.0
    %470 = vmatmul.mubr.f32.gmra.mrb[0].mxu0 %v344
    %v471 = vpop.f32.mrb[0].mxu0
    %v472 = vadd.f32 %v278, %v471
    %v473 = vpop.f32.mrb[0].mxu0
    %474 = vmatprep.mubr.f32.mxu0 0.0
    %475 = vmatmul.mubr.f32.gmra.mrb[0].mxu0 %v347
    %v476 = vpop.f32.mrb[0].mxu0
    %v477 = vadd.f32 %v283, %v476
    %v478 = vpop.f32.mrb[0].mxu0
    %479 = vmatprep.mubr.f32.mxu0 0.0
    %480 = vmatmul.mubr.f32.gmra.mrb[0].mxu0 %v350
    %v481 = vpop.f32.mrb[0].mxu0
    %v482 = vadd.f32 %v288, %v481
    %v483 = vpop.f32.mrb[0].mxu0
    %484 = vmatprep.mubr.f32.mxu0 0.0
    %485 = vmatmul.mubr.f32.gmra.mrb[0].mxu0 %v353
    %v486 = vpop.f32.mrb[0].mxu0
    %v487 = vadd.f32 %v293, %v486
    %v488 = vpop.f32.mrb[0].mxu0
    %489 = vmatprep.mubr.f32.mxu0 0.0
    %490 = vmatmul.mubr.f32.gmra.mrb[0].mxu0 %v356
    %v491 = vpop.f32.mrb[0].mxu0
    %v492 = vadd.f32 %v298, %v491
    %v493 = vpop.f32.mrb[0].mxu0
    %494 = vmatprep.mubr.f32.mxu0 0.0
    %495 = vmatmul.mubr.f32.gmra.mrb[0].mxu0 %v359
    %v496 = vpop.f32.mrb[0].mxu0
    %v497 = vadd.f32 %v303, %v496
    %v498 = vpop.f32.mrb[0].mxu0
    %499 = vmatprep.mubr.f32.mxu0 0.0
    %500 = vmatmul.mubr.f32.gmra.mrb[0].mxu0 %v362
    %v501 = vpop.f32.mrb[0].mxu0
    %v502 = vadd.f32 %v308, %v501
    %v503 = vpop.f32.mrb[0].mxu0
    %504 = vmatprep.mubr.f32.mxu0 0.0
    %505 = vmatmul.mubr.f32.gmra.mrb[0].mxu0 %v365
    %v506 = vpop.f32.mrb[0].mxu0
    %v507 = vadd.f32 %v313, %v506
    %v508 = vpop.f32.mrb[0].mxu0
    %509 = vmatprep.mubr.f32.mxu0 0.0
    %510 = vmatmul.mubr.f32.gmra.mrb[0].mxu0 %v368
    %v511 = vpop.f32.mrb[0].mxu0
    %v512 = vadd.f32 %v318, %v511
    %v513 = vpop.f32.mrb[0].mxu0
    %514 = vdwg.mxu0
    %v515 = vld [vmem:[%s4] sm:$0x1]
    %v517 = vlaneseq
    %v518 = vshrl.u32 %v517, 7
    %v519 = vsub.s32 0, %v518
    %v520 = vrot.slane %v515, %v519
    %v522 = vadd.f32 %v437, %v520
    %v523 = vadd.f32 %v442, %v520
    %v524 = vadd.f32 %v447, %v520
    %v525 = vadd.f32 %v452, %v520
    %v526 = vadd.f32 %v457, %v520
    %v527 = vadd.f32 %v462, %v520
    %v528 = vadd.f32 %v467, %v520
    %v529 = vadd.f32 %v472, %v520
    %v530 = vadd.f32 %v477, %v520
    %v531 = vadd.f32 %v482, %v520
    %v532 = vadd.f32 %v487, %v520
    %v533 = vadd.f32 %v492, %v520
    %v534 = vadd.f32 %v497, %v520
    %v535 = vadd.f32 %v502, %v520
    %v536 = vadd.f32 %v507, %v520
    %v537 = vadd.f32 %v512, %v520
    %v538 = vmax.f32 %v522, 0.0
    %v539 = vmax.f32 %v523, 0.0
    %v540 = vmax.f32 %v524, 0.0
    %v541 = vmax.f32 %v525, 0.0
    %v542 = vmax.f32 %v526, 0.0
    %v543 = vmax.f32 %v527, 0.0
    %v544 = vmax.f32 %v528, 0.0
    %v545 = vmax.f32 %v529, 0.0
    %v546 = vmax.f32 %v530, 0.0
    %v547 = vmax.f32 %v531, 0.0
    %v548 = vmax.f32 %v532, 0.0
    %v549 = vmax.f32 %v533, 0.0
    %v550 = vmax.f32 %v534, 0.0
    %v551 = vmax.f32 %v535, 0.0
    %v552 = vmax.f32 %v536, 0.0
    %v553 = vmax.f32 %v537, 0.0
    %v554 = vld [vmem:[#allocation9] sm:$0xff]
    %v555 = vld [vmem:[#allocation9 + $0x8] sm:$0xff]
    %v556 = vld [vmem:[#allocation9 + $0x10] sm:$0xff]
    %v557 = vld [vmem:[#allocation9 + $0x18] sm:$0xff]
    %v558 = vld [vmem:[%s6] sm:$0x1]
    %v560 = vlaneseq
    %v561 = vshrl.u32 %v560, 7
    %v562 = vsub.s32 0, %v561
    %v563 = vrot.slane %v558, %v562
    %v566 = vsel %vm321, %v538, 0
    %v569 = vsel %vm321, %v539, 0
    %v572 = vsel %vm321, %v540, 0
    %v575 = vsel %vm321, %v541, 0
    %v578 = vsel %vm321, %v542, 0
    %v581 = vsel %vm321, %v543, 0
    %v584 = vsel %vm321, %v544, 0
    %v587 = vsel %vm321, %v545, 0
    %v590 = vsel %vm321, %v546, 0
    %v593 = vsel %vm321, %v547, 0
    %v596 = vsel %vm321, %v548, 0
    %v599 = vsel %vm321, %v549, 0
    %v602 = vsel %vm321, %v550, 0
    %v605 = vsel %vm321, %v551, 0
    %v608 = vsel %vm321, %v552, 0
    %v611 = vsel %vm321, %v553, 0
    %613 = vmatprep.subr.mxu0 0.0
    %614 = vmatpush1.msra.mxu0 %v554
    %615 = vmatprep.subr.mxu0 0.0
    %616 = vmatpush1.msra.mxu0 %v555
    %617 = vmatprep.subr.mxu0 0.0
    %618 = vmatpush1.msra.mxu0 %v556
    %619 = vmatprep.subr.mxu0 0.0
    %620 = vmatpush1.msra.mxu0 %v557
    %621 = vmatprep.subr.mxu0 0.0
    %622 = vmatpush1.msra.mxu0 0.0
    %623 = vmatprep.subr.mxu0 0.0
    %624 = vmatpush1.msra.mxu0 0.0
    %625 = vmatprep.subr.mxu0 0.0
    %626 = vmatpush1.msra.mxu0 0.0
    %627 = vmatprep.subr.mxu0 0.0
    %628 = vmatpush1.msra.mxu0 0.0
    %629 = vmatprep.subr.mxu0 0.0
    %630 = vmatpush1.msra.mxu0 0.0
    %631 = vmatprep.subr.mxu0 0.0
    %632 = vmatpush1.msra.mxu0 0.0
    %633 = vmatprep.subr.mxu0 0.0
    %634 = vmatpush1.msra.mxu0 0.0
    %635 = vmatprep.subr.mxu0 0.0
    %636 = vmatpush1.msra.mxu0 0.0
    %637 = vmatprep.subr.mxu0 0.0
    %638 = vmatpush1.msra.mxu0 0.0
    %639 = vmatprep.subr.mxu0 0.0
    %640 = vmatpush1.msra.mxu0 0.0
    %641 = vmatprep.subr.mxu0 0.0
    %642 = vmatpush1.msra.mxu0 0.0
    %643 = vmatprep.subr.mxu0 0.0
    %644 = vmatpush1.msra.mxu0 0.0
    %645 = vmatprep.subr.mxu0 0.0
    %646 = vmatpush1.msra.mxu0 0.0
    %647 = vmatprep.subr.mxu0 0.0
    %648 = vmatpush1.msra.mxu0 0.0
    %649 = vmatprep.subr.mxu0 0.0
    %650 = vmatpush1.msra.mxu0 0.0
    %651 = vmatprep.subr.mxu0 0.0
    %652 = vmatpush1.msra.mxu0 0.0
    %653 = vmatprep.subr.mxu0 0.0
    %654 = vmatpush1.msra.mxu0 0.0
    %655 = vmatprep.subr.mxu0 0.0
    %656 = vmatpush1.msra.mxu0 0.0
    %657 = vmatprep.subr.mxu0 0.0
    %658 = vmatpush1.msra.mxu0 0.0
    %659 = vmatprep.subr.mxu0 0.0
    %660 = vmatpush1.msra.mxu0 0.0
    %661 = vmatprep.subr.mxu0 0.0
    %662 = vmatpush1.msra.mxu0 0.0
    %663 = vmatprep.subr.mxu0 0.0
    %664 = vmatpush1.msra.mxu0 0.0
    %665 = vmatprep.subr.mxu0 0.0
    %666 = vmatpush1.msra.mxu0 0.0
    %667 = vmatprep.subr.mxu0 0.0
    %668 = vmatpush1.msra.mxu0 0.0
    %669 = vmatprep.subr.mxu0 0.0
    %670 = vmatpush1.msra.mxu0 0.0
    %671 = vmatprep.subr.mxu0 0.0
    %672 = vmatpush1.msra.mxu0 0.0
    %673 = vmatprep.subr.mxu0 0.0
    %674 = vmatpush1.msra.mxu0 0.0
    %675 = vmatprep.subr.mxu0 0.0
    %676 = vmatpush1.msra.mxu0 0.0
    %677 = vmatprep.mubr.f32.mxu0 0.0
    %678 = vmatmul.mubr.f32.gmra.mrb[0].mxu0 %v566
    %v679 = vpop.f32.mrb[0].mxu0
    %v680 = vadd.f32 %v563, %v679
    %v681 = vpop.f32.mrb[0].mxu0
    %682 = vmatprep.mubr.f32.mxu0 0.0
    %683 = vmatmul.mubr.f32.gmra.mrb[0].mxu0 %v569
    %v684 = vpop.f32.mrb[0].mxu0
    %v685 = vadd.f32 %v563, %v684
    %v686 = vpop.f32.mrb[0].mxu0
    %687 = vmatprep.mubr.f32.mxu0 0.0
    %688 = vmatmul.mubr.f32.gmra.mrb[0].mxu0 %v572
    %v689 = vpop.f32.mrb[0].mxu0
    %v690 = vadd.f32 %v563, %v689
    %v691 = vpop.f32.mrb[0].mxu0
    %692 = vmatprep.mubr.f32.mxu0 0.0
    %693 = vmatmul.mubr.f32.gmra.mrb[0].mxu0 %v575
    %v694 = vpop.f32.mrb[0].mxu0
    %v695 = vadd.f32 %v563, %v694
    %v696 = vpop.f32.mrb[0].mxu0
    %697 = vmatprep.mubr.f32.mxu0 0.0
    %698 = vmatmul.mubr.f32.gmra.mrb[0].mxu0 %v578
    %v699 = vpop.f32.mrb[0].mxu0
    %v700 = vadd.f32 %v563, %v699
    %v701 = vpop.f32.mrb[0].mxu0
    %702 = vmatprep.mubr.f32.mxu0 0.0
    %703 = vmatmul.mubr.f32.gmra.mrb[0].mxu0 %v581
    %v704 = vpop.f32.mrb[0].mxu0
    %v705 = vadd.f32 %v563, %v704
    %v706 = vpop.f32.mrb[0].mxu0
    %707 = vmatprep.mubr.f32.mxu0 0.0
    %708 = vmatmul.mubr.f32.gmra.mrb[0].mxu0 %v584
    %v709 = vpop.f32.mrb[0].mxu0
    %v710 = vadd.f32 %v563, %v709
    %v711 = vpop.f32.mrb[0].mxu0
    %712 = vmatprep.mubr.f32.mxu0 0.0
    %713 = vmatmul.mubr.f32.gmra.mrb[0].mxu0 %v587
    %v714 = vpop.f32.mrb[0].mxu0
    %v715 = vadd.f32 %v563, %v714
    %v716 = vpop.f32.mrb[0].mxu0
    %717 = vmatprep.mubr.f32.mxu0 0.0
    %718 = vmatmul.mubr.f32.gmra.mrb[0].mxu0 %v590
    %v719 = vpop.f32.mrb[0].mxu0
    %v720 = vadd.f32 %v563, %v719
    %v721 = vpop.f32.mrb[0].mxu0
    %722 = vmatprep.mubr.f32.mxu0 0.0
    %723 = vmatmul.mubr.f32.gmra.mrb[0].mxu0 %v593
    %v724 = vpop.f32.mrb[0].mxu0
    %v725 = vadd.f32 %v563, %v724
    %v726 = vpop.f32.mrb[0].mxu0
    %727 = vmatprep.mubr.f32.mxu0 0.0
    %728 = vmatmul.mubr.f32.gmra.mrb[0].mxu0 %v596
    %v729 = vpop.f32.mrb[0].mxu0
    %v730 = vadd.f32 %v563, %v729
    %v731 = vpop.f32.mrb[0].mxu0
    %732 = vmatprep.mubr.f32.mxu0 0.0
    %733 = vmatmul.mubr.f32.gmra.mrb[0].mxu0 %v599
    %v734 = vpop.f32.mrb[0].mxu0
    %v735 = vadd.f32 %v563, %v734
    %v736 = vpop.f32.mrb[0].mxu0
    %737 = vmatprep.mubr.f32.mxu0 0.0
    %738 = vmatmul.mubr.f32.gmra.mrb[0].mxu0 %v602
    %v739 = vpop.f32.mrb[0].mxu0
    %v740 = vadd.f32 %v563, %v739
    %v741 = vpop.f32.mrb[0].mxu0
    %742 = vmatprep.mubr.f32.mxu0 0.0
    %743 = vmatmul.mubr.f32.gmra.mrb[0].mxu0 %v605
    %v744 = vpop.f32.mrb[0].mxu0
    %v745 = vadd.f32 %v563, %v744
    %v746 = vpop.f32.mrb[0].mxu0
    %747 = vmatprep.mubr.f32.mxu0 0.0
    %748 = vmatmul.mubr.f32.gmra.mrb[0].mxu0 %v608
    %v749 = vpop.f32.mrb[0].mxu0
    %v750 = vadd.f32 %v563, %v749
    %v751 = vpop.f32.mrb[0].mxu0
    %752 = vmatprep.mubr.f32.mxu0 0.0
    %753 = vmatmul.mubr.f32.gmra.mrb[0].mxu0 %v611
    %v754 = vpop.f32.mrb[0].mxu0
    %v755 = vadd.f32 %v563, %v754
    %v756 = vpop.f32.mrb[0].mxu0
    %757 = vdwg.mxu0
    %v758 = vmax.f32 %v680, 0.0
    %v759 = vmax.f32 %v685, 0.0
    %v760 = vmax.f32 %v690, 0.0
    %v761 = vmax.f32 %v695, 0.0
    %v762 = vmax.f32 %v700, 0.0
    %v763 = vmax.f32 %v705, 0.0
    %v764 = vmax.f32 %v710, 0.0
    %v765 = vmax.f32 %v715, 0.0
    %v766 = vmax.f32 %v720, 0.0
    %v767 = vmax.f32 %v725, 0.0
    %v768 = vmax.f32 %v730, 0.0
    %v769 = vmax.f32 %v735, 0.0
    %v770 = vmax.f32 %v740, 0.0
    %v771 = vmax.f32 %v745, 0.0
    %v772 = vmax.f32 %v750, 0.0
    %v773 = vmax.f32 %v755, 0.0
    %v774 = vld [vmem:[%s7] sm:$0x1]
    %v775 = vld [vmem:[#allocation2] sm:$0x1]
    %777 = vset.pattern.permute.xlu0 0
    %778 = vperm.xlu0 %777, %v775
    %v779 = vpop.permute.xlu0 %778
    %v781 = vlaneseq
    %v782 = vshrl.u32 %v781, 7
    %v783 = vsub.s32 0, %v782
    %v784 = vrot.slane %v779, %v783
    %v786 = vsel %vm321, %v774, 0
    %v789 = vsel %vm321, %v758, 0
    %v792 = vsel %vm321, %v759, 0
    %v795 = vsel %vm321, %v760, 0
    %v798 = vsel %vm321, %v761, 0
    %v801 = vsel %vm321, %v762, 0
    %v804 = vsel %vm321, %v763, 0
    %v807 = vsel %vm321, %v764, 0
    %v810 = vsel %vm321, %v765, 0
    %v813 = vsel %vm321, %v766, 0
    %v816 = vsel %vm321, %v767, 0
    %v819 = vsel %vm321, %v768, 0
    %v822 = vsel %vm321, %v769, 0
    %v825 = vsel %vm321, %v770, 0
    %v828 = vsel %vm321, %v771, 0
    %v831 = vsel %vm321, %v772, 0
    %v834 = vsel %vm321, %v773, 0
    %836 = vmatprep.subr.mxu0 0.0
    %837 = vmatpush1.xpose.msra.mxu0 %v789
    %838 = vmatprep.subr.mxu0 0.0
    %839 = vmatpush1.xpose.msra.mxu0 %v792
    %840 = vmatprep.subr.mxu0 0.0
    %841 = vmatpush1.xpose.msra.mxu0 %v795
    %842 = vmatprep.subr.mxu0 0.0
    %843 = vmatpush1.xpose.msra.mxu0 %v798
    %844 = vmatprep.subr.mxu0 0.0
    %845 = vmatpush1.xpose.msra.mxu0 %v801
    %846 = vmatprep.subr.mxu0 0.0
    %847 = vmatpush1.xpose.msra.mxu0 %v804
    %848 = vmatprep.subr.mxu0 0.0
    %849 = vmatpush1.xpose.msra.mxu0 %v807
    %850 = vmatprep.subr.mxu0 0.0
    %851 = vmatpush1.xpose.msra.mxu0 %v810
    %852 = vmatprep.subr.mxu0 0.0
    %853 = vmatpush1.xpose.msra.mxu0 %v813
    %854 = vmatprep.subr.mxu0 0.0
    %855 = vmatpush1.xpose.msra.mxu0 %v816
    %856 = vmatprep.subr.mxu0 0.0
    %857 = vmatpush1.xpose.msra.mxu0 %v819
    %858 = vmatprep.subr.mxu0 0.0
    %859 = vmatpush1.xpose.msra.mxu0 %v822
    %860 = vmatprep.subr.mxu0 0.0
    %861 = vmatpush1.xpose.msra.mxu0 %v825
    %862 = vmatprep.subr.mxu0 0.0
    %863 = vmatpush1.xpose.msra.mxu0 %v828
    %864 = vmatprep.subr.mxu0 0.0
    %865 = vmatpush1.xpose.msra.mxu0 %v831
    %866 = vmatprep.subr.mxu0 0.0
    %867 = vmatpush1.xpose.msra.mxu0 %v834
    %868 = vmatprep.subr.mxu0 0.0
    %869 = vmatpush1.xpose.msra.mxu0 0.0
    %870 = vmatprep.subr.mxu0 0.0
    %871 = vmatpush1.xpose.msra.mxu0 0.0
    %872 = vmatprep.subr.mxu0 0.0
    %873 = vmatpush1.xpose.msra.mxu0 0.0
    %874 = vmatprep.subr.mxu0 0.0
    %875 = vmatpush1.xpose.msra.mxu0 0.0
    %876 = vmatprep.subr.mxu0 0.0
    %877 = vmatpush1.xpose.msra.mxu0 0.0
    %878 = vmatprep.subr.mxu0 0.0
    %879 = vmatpush1.xpose.msra.mxu0 0.0
    %880 = vmatprep.subr.mxu0 0.0
    %881 = vmatpush1.xpose.msra.mxu0 0.0
    %882 = vmatprep.subr.mxu0 0.0
    %883 = vmatpush1.xpose.msra.mxu0 0.0
    %884 = vmatprep.subr.mxu0 0.0
    %885 = vmatpush1.xpose.msra.mxu0 0.0
    %886 = vmatprep.subr.mxu0 0.0
    %887 = vmatpush1.xpose.msra.mxu0 0.0
    %888 = vmatprep.subr.mxu0 0.0
    %889 = vmatpush1.xpose.msra.mxu0 0.0
    %890 = vmatprep.subr.mxu0 0.0
    %891 = vmatpush1.xpose.msra.mxu0 0.0
    %892 = vmatprep.subr.mxu0 0.0
    %893 = vmatpush1.xpose.msra.mxu0 0.0
    %894 = vmatprep.subr.mxu0 0.0
    %895 = vmatpush1.xpose.msra.mxu0 0.0
    %896 = vmatprep.subr.mxu0 0.0
    %897 = vmatpush1.xpose.msra.mxu0 0.0
    %898 = vmatprep.subr.mxu0 0.0
    %899 = vmatpush1.xpose.msra.mxu0 0.0
    %900 = vmatprep.mubr.f32.mxu0 0.0
    %901 = vmatmul.mubr.f32.gmra.mrb[0].mxu0 %v786
    %v902 = vpop.f32.mrb[0].mxu0
    %v903 = vadd.f32 %v784, %v902
    %v904 = vpop.f32.mrb[0].mxu0
    %905 = vdwg.mxu0
    %906 = vst [vmem:[#allocation11] sm:$0x1] %v903
    // Predicated region
    $region54: #{tpu_custom_call.1} parent=1 // pred_check
      _
    $region55: #{tpu_custom_call.1} parent=1 // pred_check_branch
      %908 = sbr.rel (0) target = $region57
    $region56: #{tpu_custom_call.1} parent=1 // pred_region
      %s910 = ssub.s32 16, 16
      %911 = vsyncadd [#allocation5], %s910
      %s913 = sshll.u32 [#allocation11], 4
      %s914 = int_to_ptr.vmem [resolvable:$true] %s913
      %916 = dma.vmem_to_hbm [thread:$0]  %s914, 16, %s9, [#allocation5]
    $region57: #{tpu_custom_call.1} parent=1 // pred_fallthru
      _
    // Predicated region
    $region58: #{tpu_custom_call.1} parent=1 // pred_check
      _
    $region59: #{tpu_custom_call.1} parent=1 // pred_check_branch
      %918 = sbr.rel (0) target = $region61
    $region60: #{tpu_custom_call.1} parent=1 // pred_region
      %919 = dma.done [#allocation5], 16
    $region61: #{tpu_custom_call.1} parent=1 // pred_fallthru
      _
    %920 = vsyncpa [#allocation4], 1
    %921 = vsyncpa [#allocation7], 1
    %922 = vsyncpa [#allocation10], 1
    %923 = vsyncpa [#allocation5], 1

</llo_original>
